<compile_context>
chip_gen: v7x
topology: tpu7x:2x2x1
jax: 0.10.0
libtpu: 0.0.40
codegen_flags: <defaults>
</compile_context>

<pallas_src>
import jax
import jax.numpy as jnp
from jax.experimental import pallas as pl
from jax.experimental.pallas import tpu as pltpu


_VMEM_LIMIT_BYTES = 48 * 1024 * 1024   # < 64 MiB physical on v7x; ample on v5e/v6e (128 MiB)
_TARGET_TILE_BYTES = 2 * 1024 * 1024   # ~2 MiB activation tiles: amortizes ~0.35 us/step overhead
_MAX_TM = 8192


def _rect_pred_kernel(x_ref, w_ref, b_ref, o_ref):
    # x_ref: (TM, K)   w_ref: (K, N)   b_ref: (1, N)   o_ref: (TM, N)
    acc = jnp.dot(x_ref[...], w_ref[...], preferred_element_type=jnp.float32)
    o_ref[...] = (acc + b_ref[...]).astype(o_ref.dtype)


def _pick_tm(m_rows, in_cols, out_cols, in_bytes, out_bytes,
             vmem_limit=_VMEM_LIMIT_BYTES):
    """Row tile sized by bytes; double-buffered footprint checked vs the VMEM limit."""
    tm = (_TARGET_TILE_BYTES // max(1, in_cols * in_bytes)) // 128 * 128
    tm = max(128, min(tm, _MAX_TM))

    budget = int(0.6 * vmem_limit)  # headroom for weight/bias/pipeline internals

    def footprint(t):
        return (2 * t * in_cols * in_bytes        # double-buffered activation tiles
                + 2 * t * out_cols * out_bytes    # double-buffered output tiles
                + in_cols * out_cols * 4          # resident weight
                + out_cols * 4)                   # resident bias

    while tm > 128 and footprint(tm) > budget:
        tm = max(128, (tm // 2) // 128 * 128)

    if tm >= m_rows:
        return m_rows                             # single full block (always a legal shape)
    return tm


def _linear_rowtiled(x2d, w2d, b2d, out_dtype, tm):
    """(M, K) @ (K, N) + b, tiled along rows. Ragged last tile handled by Pallas."""
    M, K = x2d.shape
    N = w2d.shape[1]
    grid_m = pl.cdiv(M, tm)   # no padding: edge block reads padded, writes masked

    cost = pl.CostEstimate(
        flops=2 * M * K * N,
        transcendentals=0,
        bytes_accessed=(M * K * x2d.dtype.itemsize
                        + K * N * w2d.dtype.itemsize
                        + N * b2d.dtype.itemsize
                        + M * N * jnp.dtype(out_dtype).itemsize),
    )

    return pl.pallas_call(
        _rect_pred_kernel,
        out_shape=jax.ShapeDtypeStruct((M, N), out_dtype),
        grid=(grid_m,),
        in_specs=[
            pl.BlockSpec((tm, K), lambda i: (i, 0)),   # activation: tiled along rows
            pl.BlockSpec((K, N), lambda i: (0, 0)),    # weight: resident across the grid
            pl.BlockSpec((1, N), lambda i: (0, 0)),    # bias: resident
        ],
        out_specs=pl.BlockSpec((tm, N), lambda i: (i, 0)),
        compiler_params=pltpu.CompilerParams(
            dimension_semantics=("parallel",),          # row tiles shard across TCs (v7x)
            vmem_limit_bytes=_VMEM_LIMIT_BYTES,         # same budget used by _pick_tm
        ),
        cost_estimate=cost,
    )(x2d, w2d, b2d)


def rect_pred_forward(feature, weight, bias, *, tm=None):
    """feature: (B, ..., C); weight: (4, C); bias: (4,) -> (B, prod(...)*4)."""
    B = feature.shape[0]
    C = feature.shape[-1]
    M = 1
    for d in feature.shape[:-1]:
        M *= d
    n_out = weight.shape[0]                       # = 4
    out_dtype = feature.dtype
    in_bytes = jnp.dtype(feature.dtype).itemsize
    out_bytes = jnp.dtype(out_dtype).itemsize
    b_row = bias.reshape(1, n_out).astype(jnp.float32)

    # Small-C fast path: pack G = 128/C rows of the activation per lane-row
    # (free reshape) and use a block-diagonal weight so loads, the MXU
    # contraction and the stores are all lane-dense. Output reshapes back to
    # (M, 4) for free -- no wrapper-side transpose pass.
    use_packed = (C < 128) and (128 % C == 0) and ((M * C) % 128 == 0)
    if use_packed:
        G = 128 // C
        x2d = feature.reshape((M * C) // 128, 128)
        w2d = jnp.kron(jnp.eye(G, dtype=weight.dtype), weight.T)   # (128, 4*G) block-diag
        b2d = jnp.tile(b_row, (1, G))                              # (1, 4*G)
    else:
        x2d = feature.reshape(M, C)
        w2d = weight.T                                             # (C, 4): MXU-native
        b2d = b_row

    m_rows = x2d.shape[0]
    n_cols = w2d.shape[1]
    if tm is None:
        tm = _pick_tm(m_rows, x2d.shape[1], n_cols, in_bytes, out_bytes)
    else:
        # Enforce a legal tile: full-block if big enough, else a multiple of 128.
        tm = m_rows if tm >= m_rows else max(128, (tm // 128) * 128)

    out2d = _linear_rowtiled(x2d, w2d, b2d, out_dtype, tm)         # (m_rows, n_cols)

    # Free reshapes back to the PyTorch view: (..., 4) -> (B, -1).
    return out2d.reshape(M, n_out).reshape(B, -1)


if __name__ == "__main__":
    key = jax.random.PRNGKey(0)
    k_feat, k_w, k_b = jax.random.split(key, 3)

    def make_params(C):
        bound = 1.0 / jnp.sqrt(jnp.float32(C))
        w = jax.random.uniform(k_w, (4, C), minval=-bound, maxval=bound,
                               dtype=jnp.float32)
        b = jax.random.uniform(k_b, (4,), minval=-bound, maxval=bound,
                               dtype=jnp.float32)
        return w, b

    def check(feature, weight, bias, tm=None, tol=1e-4):
        out = rect_pred_forward(feature, weight, bias, tm=tm)
        jax.block_until_ready(out)
        ref = (feature @ weight.T + bias).reshape(feature.shape[0], -1)
        assert out.shape == ref.shape, (out.shape, ref.shape)
        assert jnp.allclose(out, ref, atol=tol, rtol=tol), "mismatch vs reference"

    # 1) Small shapes consistent with the module (batch=2, seq=8, outChannels=32)
    #    -> exercises the packed (lane-dense) small-C path.
    B, S, C = 2, 8, 32
    feature = jax.random.normal(k_feat, (B, S, C), dtype=jnp.float32)
    weight, bias = make_params(C)
    check(feature, weight, bias)

    # 2) C that does not divide 128 -> exercises the general (TM, C) @ (C, 4) path.
    C2 = 48
    feature2 = jax.random.normal(k_feat, (B, S, C2), dtype=jnp.float32)
    weight2, bias2 = make_params(C2)
    check(feature2, weight2, bias2)

    # 3) Multi-tile grid with a ragged last tile (no padding in the wrapper).
    B3, S3 = 2, 300                       # M=600 -> packed rows=150, tm=128 -> grid=2
    feature3 = jax.random.normal(k_feat, (B3, S3, C), dtype=jnp.float32)
    check(feature3, weight, bias, tm=128)

    print("KERNEL_OK")
</pallas_src>

<mosaic_0001>
module attributes {stable_mosaic.version = 11 : i64} {
  func.func @_rect_pred_kernel(%arg0: i32, %arg1: memref<4x128xf32, #tpu.memory_space<vmem>>, %arg2: memref<128x16xf32, #tpu.memory_space<vmem>>, %arg3: memref<1x16xf32, #tpu.memory_space<vmem>>, %arg4: memref<4x16xf32, #tpu.memory_space<vmem>>) attributes {dimension_semantics = [#tpu.dimension_semantics<parallel>], iteration_bounds = array<i64: 1>, scalar_prefetch = 0 : i64, scratch_operands = 0 : i64, tpu.core_type = #tpu.core_type<tc>, window_params = [{transform_indices = @transform_0, window_bounds = array<i64: 4, 128>}, {pipeline_mode = #tpu.pipeline_mode<synchronous>, transform_indices = @transform_1, window_bounds = array<i64: 128, 16>}, {pipeline_mode = #tpu.pipeline_mode<synchronous>, transform_indices = @transform_2, window_bounds = array<i64: 1, 16>}, {transform_indices = @transform_3, window_bounds = array<i64: 4, 16>}]} {
    %c0 = arith.constant 0 : index
    %c0_0 = arith.constant 0 : index
    %0 = vector.load %arg1[%c0, %c0_0] : memref<4x128xf32, #tpu.memory_space<vmem>>, vector<4x128xf32>
    %c0_1 = arith.constant 0 : index
    %c0_2 = arith.constant 0 : index
    %1 = vector.load %arg2[%c0_1, %c0_2] : memref<128x16xf32, #tpu.memory_space<vmem>>, vector<128x16xf32>
    %cst = arith.constant dense<0.000000e+00> : vector<4x16xf32>
    %2 = tpu.matmul %0, %1, %cst {dimension_numbers = #tpu.dot_dimension_numbers<[1], [0], [0], [1], [0, 0, 1, 1], [], []>} : vector<4x128xf32>, vector<128x16xf32>, vector<4x16xf32> -> vector<4x16xf32>
    %c0_3 = arith.constant 0 : index
    %c0_4 = arith.constant 0 : index
    %3 = vector.load %arg3[%c0_3, %c0_4] : memref<1x16xf32, #tpu.memory_space<vmem>>, vector<1x16xf32>
    %4 = vector.broadcast %3 : vector<1x16xf32> to vector<4x16xf32>
    %5 = arith.addf %2, %4 : vector<4x16xf32>
    %c0_5 = arith.constant 0 : index
    %c0_6 = arith.constant 0 : index
    %6 = vector.load %arg4[%c0_5, %c0_6] : memref<4x16xf32, #tpu.memory_space<vmem>>, vector<4x16xf32>
    tpu.vector_store %arg4[%c0_5, %c0_6], %5 {strides = array<i32>} : memref<4x16xf32, #tpu.memory_space<vmem>>, vector<4x16xf32>,
    return
  }
  func.func @transform_0(%arg0: i32) -> (i32, i32) {
    %c0_i32 = arith.constant 0 : i32
    %c0_i32_0 = arith.constant 0 : i32
    return %arg0, %c0_i32 : i32, i32
  }
  func.func @transform_1(%arg0: i32) -> (i32, i32) {
    %c0_i32 = arith.constant 0 : i32
    %c0_i32_0 = arith.constant 0 : i32
    %c0_i32_1 = arith.constant 0 : i32
    return %c0_i32, %c0_i32_0 : i32, i32
  }
  func.func @transform_2(%arg0: i32) -> (i32, i32) {
    %c0_i32 = arith.constant 0 : i32
    %c0_i32_0 = arith.constant 0 : i32
    %c0_i32_1 = arith.constant 0 : i32
    return %c0_i32, %c0_i32_0 : i32, i32
  }
  func.func @transform_3(%arg0: i32) -> (i32, i32) {
    %c0_i32 = arith.constant 0 : i32
    %c0_i32_0 = arith.constant 0 : i32
    return %arg0, %c0_i32 : i32, i32
  }
}

</mosaic_0001>

<llo_original>
// kernel: tpu_custom_call.1
$region0: #{tpu_custom_call.1}
  #allocation0 [shape = 'u32[]', space=smem, size = 0x4, offset = 0x4, fixed_abs, tag = 'smem constant byte address 0x4 - core index']
  #allocation1 [shape = 'u32[144,128]{1,0:T(1,128)}', space=vmem, size = 0x12000, scoped, tag = 'internal scratch']
  %s0 = inlined_call_operand.vmem [shape: f32[4,128], index: 0, kind: input, shape index: {}]
  %s1 = inlined_call_operand.vmem [shape: f32[128,16], index: 1, kind: input, shape index: {}]
  %s2 = inlined_call_operand.vmem [shape: f32[1,16], index: 2, kind: input, shape index: {}]
  %s3 = inlined_call_operand.hbm [shape: f32[4,16], index: 3, kind: output, shape index: {}]
  %s4 = sld [smem:[#allocation0]]
  $region22: #{tpu_custom_call.1} parent=0
    _
  %s6 = ssub.s32 1, %s4
  %s7 = scalar_select 0, %s6, %s4
  $region1: #{tpu_custom_call.1} parent=0
    #allocation2 [shape = 'u8[2048]{0}', space=vmem, size = 0x800, scoped, tag = 'output window, operand 0, single buffered']
    #allocation3 [shape = 's32[1]{0}', space=sflag, size = 0x4, scoped, tag = 'scoped memory for tpu_custom_call.1']
    %8 = vsyncpa [#allocation3], 0
    // Predicated region
    $region2: #{tpu_custom_call.1} parent=1 // pred_check
      _
    $region3: #{tpu_custom_call.1} parent=1 // pred_check_branch
      %10 = sbr.rel (0) target = $region5
    $region4: #{tpu_custom_call.1} parent=1 // pred_region
      _
    $region5: #{tpu_custom_call.1} parent=1 // pred_fallthru
      _
    // Predicated region
    $region6: #{tpu_custom_call.1} parent=1 // pred_check
      _
    $region7: #{tpu_custom_call.1} parent=1 // pred_check_branch
      %12 = sbr.rel (0) target = $region9
    $region8: #{tpu_custom_call.1} parent=1 // pred_region
      _
    $region9: #{tpu_custom_call.1} parent=1 // pred_fallthru
      _
    // Predicated region
    $region10: #{tpu_custom_call.1} parent=1 // pred_check
      _
    $region11: #{tpu_custom_call.1} parent=1 // pred_check_branch
      %14 = sbr.rel (0) target = $region13
    $region12: #{tpu_custom_call.1} parent=1 // pred_region
      _
    $region13: #{tpu_custom_call.1} parent=1 // pred_fallthru
      _
    %v15 = vld [vmem:[%s0] sm:$0xf]
    %v16 = vld [vmem:[%s1] sm:$0xff]
    %v17 = vld [vmem:[%s1 + $0x8] sm:$0xff]
    %v18 = vld [vmem:[%s1 + $0x10] sm:$0xff]
    %v19 = vld [vmem:[%s1 + $0x18] sm:$0xff]
    %v20 = vld [vmem:[%s1 + $0x20] sm:$0xff]
    %v21 = vld [vmem:[%s1 + $0x28] sm:$0xff]
    %v22 = vld [vmem:[%s1 + $0x30] sm:$0xff]
    %v23 = vld [vmem:[%s1 + $0x38] sm:$0xff]
    %v24 = vld [vmem:[%s1 + $0x40] sm:$0xff]
    %v25 = vld [vmem:[%s1 + $0x48] sm:$0xff]
    %v26 = vld [vmem:[%s1 + $0x50] sm:$0xff]
    %v27 = vld [vmem:[%s1 + $0x58] sm:$0xff]
    %v28 = vld [vmem:[%s1 + $0x60] sm:$0xff]
    %v29 = vld [vmem:[%s1 + $0x68] sm:$0xff]
    %v30 = vld [vmem:[%s1 + $0x70] sm:$0xff]
    %v31 = vld [vmem:[%s1 + $0x78] sm:$0xff]
    %v32 = vld [vmem:[%s2] sm:$0x1]
    %v34 = vlaneseq
    %v35 = vshrl.u32 %v34, 7
    %v36 = vsub.s32 0, %v35
    %v37 = vrot.slane %v32, %v36
    %39 = vmatprep.subr.mxu0 0.0
    %40 = vmatpush1.msra.mxu0 %v16
    %41 = vmatprep.subr.mxu0 0.0
    %42 = vmatpush1.msra.mxu0 %v17
    %43 = vmatprep.subr.mxu0 0.0
    %44 = vmatpush1.msra.mxu0 %v18
    %45 = vmatprep.subr.mxu0 0.0
    %46 = vmatpush1.msra.mxu0 %v19
    %47 = vmatprep.subr.mxu0 0.0
    %48 = vmatpush1.msra.mxu0 %v20
    %49 = vmatprep.subr.mxu0 0.0
    %50 = vmatpush1.msra.mxu0 %v21
    %51 = vmatprep.subr.mxu0 0.0
    %52 = vmatpush1.msra.mxu0 %v22
    %53 = vmatprep.subr.mxu0 0.0
    %54 = vmatpush1.msra.mxu0 %v23
    %55 = vmatprep.subr.mxu0 0.0
    %56 = vmatpush1.msra.mxu0 %v24
    %57 = vmatprep.subr.mxu0 0.0
    %58 = vmatpush1.msra.mxu0 %v25
    %59 = vmatprep.subr.mxu0 0.0
    %60 = vmatpush1.msra.mxu0 %v26
    %61 = vmatprep.subr.mxu0 0.0
    %62 = vmatpush1.msra.mxu0 %v27
    %63 = vmatprep.subr.mxu0 0.0
    %64 = vmatpush1.msra.mxu0 %v28
    %65 = vmatprep.subr.mxu0 0.0
    %66 = vmatpush1.msra.mxu0 %v29
    %67 = vmatprep.subr.mxu0 0.0
    %68 = vmatpush1.msra.mxu0 %v30
    %69 = vmatprep.subr.mxu0 0.0
    %70 = vmatpush1.msra.mxu0 %v31
    %71 = vmatprep.subr.mxu0 0.0
    %72 = vmatpush1.msra.mxu0 0.0
    %73 = vmatprep.subr.mxu0 0.0
    %74 = vmatpush1.msra.mxu0 0.0
    %75 = vmatprep.subr.mxu0 0.0
    %76 = vmatpush1.msra.mxu0 0.0
    %77 = vmatprep.subr.mxu0 0.0
    %78 = vmatpush1.msra.mxu0 0.0
    %79 = vmatprep.subr.mxu0 0.0
    %80 = vmatpush1.msra.mxu0 0.0
    %81 = vmatprep.subr.mxu0 0.0
    %82 = vmatpush1.msra.mxu0 0.0
    %83 = vmatprep.subr.mxu0 0.0
    %84 = vmatpush1.msra.mxu0 0.0
    %85 = vmatprep.subr.mxu0 0.0
    %86 = vmatpush1.msra.mxu0 0.0
    %87 = vmatprep.subr.mxu0 0.0
    %88 = vmatpush1.msra.mxu0 0.0
    %89 = vmatprep.subr.mxu0 0.0
    %90 = vmatpush1.msra.mxu0 0.0
    %91 = vmatprep.subr.mxu0 0.0
    %92 = vmatpush1.msra.mxu0 0.0
    %93 = vmatprep.subr.mxu0 0.0
    %94 = vmatpush1.msra.mxu0 0.0
    %95 = vmatprep.subr.mxu0 0.0
    %96 = vmatpush1.msra.mxu0 0.0
    %97 = vmatprep.subr.mxu0 0.0
    %98 = vmatpush1.msra.mxu0 0.0
    %99 = vmatprep.subr.mxu0 0.0
    %100 = vmatpush1.msra.mxu0 0.0
    %101 = vmatprep.subr.mxu0 0.0
    %102 = vmatpush1.msra.mxu0 0.0
    %103 = vmatprep.mubr.f32.mxu0 0.0
    %104 = vmatmul.mubr.f32.gmra.mrb[0].mxu0 %v15
    %v105 = vpop.f32.mrb[0].mxu0
    %v106 = vadd.f32 %v37, %v105
    %v107 = vpop.f32.mrb[0].mxu0
    %108 = vdwg.mxu0
    %vm109 = vcmask 125952
    %110 = vst.msk [vmem:[#allocation2] sm:$0xf] %vm109, %v106
    // Predicated region
    $region14: #{tpu_custom_call.1} parent=1 // pred_check
      _
    $region15: #{tpu_custom_call.1} parent=1 // pred_check_branch
      %112 = sbr.rel (0) target = $region17
    $region16: #{tpu_custom_call.1} parent=1 // pred_region
      %s114 = ssub.s32 64, 64
      %115 = vsyncadd [#allocation3], %s114
      %s117 = sshll.u32 [#allocation2], 4
      %s118 = int_to_ptr.vmem [resolvable:$true] %s117
      %120 = dma.vmem_to_hbm [thread:$0]  %s118, 64, %s3, [#allocation3]
    $region17: #{tpu_custom_call.1} parent=1 // pred_fallthru
      _
    // Predicated region
    $region18: #{tpu_custom_call.1} parent=1 // pred_check
      _
    $region19: #{tpu_custom_call.1} parent=1 // pred_check_branch
      %122 = sbr.rel (0) target = $region21
    $region20: #{tpu_custom_call.1} parent=1 // pred_region
      %123 = dma.done [#allocation3], 64
    $region21: #{tpu_custom_call.1} parent=1 // pred_fallthru
      _
    %124 = vsyncpa [#allocation3], 1

</llo_original>
